<compile_context>
chip_gen: v7x
topology: tpu7x:2x2x1
jax: 0.10.0
libtpu: 0.0.40
codegen_flags: <defaults>
</compile_context>

<pallas_src>
import functools

import jax
import jax.numpy as jnp
from jax.experimental import pallas as pl
from jax.experimental.pallas import tpu as pltpu


def _sliding_window_mean(x, kernel_size, pad, out_len, out_dtype):
    """x: (L, lanes) tile. Returns (out_len, lanes) replicate-padded moving mean."""
    xf = x.astype(jnp.float32)
    L, lanes = xf.shape
    if pad > 0:
        front = jnp.broadcast_to(xf[0:1, :], (pad, lanes))
        end = jnp.broadcast_to(xf[L - 1:L, :], (pad, lanes))
        xp = jnp.concatenate([front, xf, end], axis=0)
    else:
        xp = xf
    Lp = L + 2 * pad

    # Power-of-two window sums: pows[p][t] = sum_{j < p} xp[t + j].
    pows = {1: xp}
    p = 1
    while 2 * p <= kernel_size:
        prev = pows[p]
        n = Lp - 2 * p + 1
        pows[2 * p] = prev[0:n, :] + prev[p:p + n, :]
        p *= 2

    # Greedy binary decomposition of the k-wide window into the pyramid levels.
    acc = None
    off = 0
    rem = kernel_size
    while rem > 0:
        q = 1 << (rem.bit_length() - 1)
        piece = pows[q][off:off + out_len, :]
        acc = piece if acc is None else acc + piece
        off += q
        rem -= q
    return (acc * (1.0 / kernel_size)).astype(out_dtype)


def _mavg_kernel(x_ref, o_ref, *, kernel_size, pad):
    o_ref[...] = _sliding_window_mean(
        x_ref[...], kernel_size, pad, o_ref.shape[0], o_ref.dtype)


def _round_up(v, m):
    return (v + m - 1) // m * m


def _pick_lane_block(total_lanes, time_len, target_bytes=1 << 20, max_lanes=512):
    """Lane-chunk size: ~target_bytes per tile, multiple of 128, >= 2 grid steps."""
    if total_lanes <= 128:
        return total_lanes                      # full lane extent (allowed block)
    blk = (target_bytes // (time_len * 4)) // 128 * 128
    blk = max(128, min(max_lanes, blk))
    # Prefer at least two grid steps so v7x megacore can use both TensorCores.
    blk = min(blk, _round_up(-(-total_lanes // 2), 128))
    return blk


def moving_avg(x, kernel_size, stride):
    """JAX/Pallas equivalent of the PyTorch moving_avg module. x: (B, L, C)."""
    B, L, C = x.shape
    pad = (kernel_size - 1) // 2
    L_pad = L + 2 * pad
    L_sum = L_pad - kernel_size + 1             # number of stride-1 windows
    assert L_sum >= 1, "sequence too short for this kernel_size"

    kernel = functools.partial(_mavg_kernel, kernel_size=kernel_size, pad=pad)
    vmem_limit = 32 * 1024 * 1024               # safe on v5e/v6e/v7x scoped VMEM

    if C >= 128:
        # Channels already lane-dense: keep (B, L, C), tile the channel axis.
        ct = _pick_lane_block(C, L_pad)
        out = pl.pallas_call(
            kernel,
            out_shape=jax.ShapeDtypeStruct((B, L_sum, C), x.dtype),
            grid_spec=pltpu.PrefetchScalarGridSpec(
                num_scalar_prefetch=0,
                grid=(B, pl.cdiv(C, ct)),
                in_specs=[pl.BlockSpec((None, L, ct), lambda b, c: (b, 0, c))],
                out_specs=pl.BlockSpec((None, L_sum, ct), lambda b, c: (b, 0, c)),
            ),
            compiler_params=pltpu.CompilerParams(
                dimension_semantics=("parallel", "parallel"),
                vmem_limit_bytes=vmem_limit),
        )(x)
        if stride != 1:
            # TODO(synk): compute only the strided windows inside the kernel
            # (DLinear's series_decomp always uses stride=1, so this is cold).
            out = out[:, ::stride, :]
        return out

    # Small channel count: fuse (batch, channel) onto the lane axis so vregs
    # and output stores are dense (time-major slab is layout plumbing only).
    total = B * C
    xt = jnp.transpose(x, (1, 0, 2)).reshape(L, total)
    nt = _pick_lane_block(total, L_pad)
    out2 = pl.pallas_call(
        kernel,
        out_shape=jax.ShapeDtypeStruct((L_sum, total), x.dtype),
        grid_spec=pltpu.PrefetchScalarGridSpec(
            num_scalar_prefetch=0,
            grid=(pl.cdiv(total, nt),),
            in_specs=[pl.BlockSpec((L, nt), lambda i: (0, i))],
            out_specs=pl.BlockSpec((L_sum, nt), lambda i: (0, i)),
        ),
        compiler_params=pltpu.CompilerParams(
            dimension_semantics=("parallel",),
            vmem_limit_bytes=vmem_limit),
    )(xt)
    if stride != 1:
        # TODO(synk): compute only the strided windows inside the kernel.
        out2 = out2[::stride, :]
    return jnp.transpose(out2.reshape(out2.shape[0], B, C), (1, 0, 2))


def moving_avg_ref(x, kernel_size, stride):
    """Pure-JAX reference matching the PyTorch module."""
    B, L, C = x.shape
    pad = (kernel_size - 1) // 2
    front = jnp.broadcast_to(x[:, 0:1, :], (B, pad, C))
    end = jnp.broadcast_to(x[:, L - 1:L, :], (B, pad, C))
    xp = jnp.concatenate([front, x, end], axis=1)
    L_padded = xp.shape[1]
    L_out = (L_padded - kernel_size) // stride + 1
    windows = jnp.stack(
        [xp[:, t * stride:t * stride + kernel_size, :] for t in range(L_out)],
        axis=1)
    return windows.mean(axis=2)


if __name__ == "__main__":
    key = jax.random.PRNGKey(0)
    cases = [
        # (B, L, C, kernel_size, stride)
        (2, 16, 8, 5, 1),      # small-C path (lanes = B*C), odd kernel
        (2, 16, 128, 25, 1),   # lane-dense-C path, DLinear default kernel size
        (2, 16, 8, 4, 2),      # even kernel + stride>1 (wrapper subsample)
    ]
    for i, (B, L, C, k, s) in enumerate(cases):
        key, sub = jax.random.split(key)
        x = jax.random.normal(sub, (B, L, C), dtype=jnp.float32)
        out = jax.block_until_ready(moving_avg(x, k, s))
        ref = moving_avg_ref(x, k, s)
        assert out.shape == ref.shape, (i, out.shape, ref.shape)
        assert jnp.allclose(out, ref, atol=1e-5, rtol=1e-5), f"mismatch in case {i}"
    print("KERNEL_OK")
</pallas_src>

<mosaic_0001>
module attributes {stable_mosaic.version = 11 : i64} {
  func.func @_mavg_kernel(%arg0: i32, %arg1: memref<16x16xf32, #tpu.memory_space<vmem>>, %arg2: memref<16x16xf32, #tpu.memory_space<vmem>>) attributes {dimension_semantics = [#tpu.dimension_semantics<parallel>], iteration_bounds = array<i64: 1>, scalar_prefetch = 0 : i64, scratch_operands = 0 : i64, tpu.core_type = #tpu.core_type<tc>, window_params = [{transform_indices = @transform_0, window_bounds = array<i64: 16, 16>}, {transform_indices = @transform_1, window_bounds = array<i64: 16, 16>}]} {
    %c0 = arith.constant 0 : index
    %c0_0 = arith.constant 0 : index
    %0 = vector.load %arg1[%c0, %c0_0] : memref<16x16xf32, #tpu.memory_space<vmem>>, vector<16x16xf32>
    %1 = vector.extract_strided_slice %0 {offsets = [0, 0], sizes = [1, 16], strides = [1, 1]} : vector<16x16xf32> to vector<1x16xf32>
    %2 = vector.shape_cast %1 : vector<1x16xf32> to vector<1x16xf32>
    %3 = vector.broadcast %2 : vector<1x16xf32> to vector<2x16xf32>
    %4 = vector.extract_strided_slice %0 {offsets = [15, 0], sizes = [1, 16], strides = [1, 1]} : vector<16x16xf32> to vector<1x16xf32>
    %5 = vector.shape_cast %4 : vector<1x16xf32> to vector<1x16xf32>
    %6 = vector.broadcast %5 : vector<1x16xf32> to vector<2x16xf32>
    %7 = tpu.concatenate %3, %0, %6 in 0 : vector<2x16xf32>, vector<16x16xf32>, vector<2x16xf32> -> vector<20x16xf32>
    %8 = vector.extract_strided_slice %7 {offsets = [0, 0], sizes = [19, 16], strides = [1, 1]} : vector<20x16xf32> to vector<19x16xf32>
    %9 = vector.extract_strided_slice %7 {offsets = [1, 0], sizes = [19, 16], strides = [1, 1]} : vector<20x16xf32> to vector<19x16xf32>
    %10 = arith.addf %8, %9 : vector<19x16xf32>
    %11 = vector.extract_strided_slice %10 {offsets = [0, 0], sizes = [17, 16], strides = [1, 1]} : vector<19x16xf32> to vector<17x16xf32>
    %12 = vector.extract_strided_slice %10 {offsets = [2, 0], sizes = [17, 16], strides = [1, 1]} : vector<19x16xf32> to vector<17x16xf32>
    %13 = arith.addf %11, %12 : vector<17x16xf32>
    %14 = vector.extract_strided_slice %13 {offsets = [0, 0], sizes = [16, 16], strides = [1, 1]} : vector<17x16xf32> to vector<16x16xf32>
    %15 = vector.extract_strided_slice %7 {offsets = [4, 0], sizes = [16, 16], strides = [1, 1]} : vector<20x16xf32> to vector<16x16xf32>
    %16 = arith.addf %14, %15 : vector<16x16xf32>
    %cst = arith.constant 2.000000e-01 : f32
    %17 = vector.broadcast %cst : f32 to vector<16x16xf32>
    %18 = arith.mulf %16, %17 : vector<16x16xf32>
    %c0_1 = arith.constant 0 : index
    %c0_2 = arith.constant 0 : index
    %19 = vector.load %arg2[%c0_1, %c0_2] : memref<16x16xf32, #tpu.memory_space<vmem>>, vector<16x16xf32>
    tpu.vector_store %arg2[%c0_1, %c0_2], %18 {strides = array<i32>} : memref<16x16xf32, #tpu.memory_space<vmem>>, vector<16x16xf32>,
    return
  }
  func.func @transform_0(%arg0: i32) -> (i32, i32) {
    %c0_i32 = arith.constant 0 : i32
    %c0_i32_0 = arith.constant 0 : i32
    return %c0_i32, %arg0 : i32, i32
  }
  func.func @transform_1(%arg0: i32) -> (i32, i32) {
    %c0_i32 = arith.constant 0 : i32
    %c0_i32_0 = arith.constant 0 : i32
    return %c0_i32, %arg0 : i32, i32
  }
}

</mosaic_0001>

<llo_original>
// kernel: tpu_custom_call.1
$region0: #{tpu_custom_call.1}
  #allocation0 [shape = 'u32[]', space=smem, size = 0x4, offset = 0x4, fixed_abs, tag = 'smem constant byte address 0x4 - core index']
  #allocation1 [shape = 'u32[144,128]{1,0:T(1,128)}', space=vmem, size = 0x12000, scoped, tag = 'internal scratch']
  %s0 = inlined_call_operand.hbm [shape: f32[16,16], index: 0, kind: input, shape index: {}]
  %s1 = inlined_call_operand.hbm [shape: f32[16,16], index: 1, kind: output, shape index: {}]
  %s2 = sld [smem:[#allocation0]]
  $region18: #{tpu_custom_call.1} parent=0
    _
  %s4 = ssub.s32 1, %s2
  %s5 = scalar_select 0, %s4, %s2
  $region1: #{tpu_custom_call.1} parent=0
    #allocation2 [shape = 'u8[8192]{0}', space=vmem, size = 0x2000, scoped, tag = 'input window, operand 0, single buffered']
    #allocation3 [shape = 's32[1]{0}', space=sflag, size = 0x4, scoped, tag = 'scoped memory for tpu_custom_call.1']
    #allocation4 [shape = 's32[1]{0}', space=sflag, size = 0x4, scoped, tag = 'scoped memory for tpu_custom_call.1']
    #allocation5 [shape = 'u8[8192]{0}', space=vmem, size = 0x2000, scoped, tag = 'output window, operand 0, single buffered']
    %6 = vsyncpa [#allocation3], 0
    %7 = vsyncpa [#allocation4], 0
    // Predicated region
    $region2: #{tpu_custom_call.1} parent=1 // pred_check
      _
    $region3: #{tpu_custom_call.1} parent=1 // pred_check_branch
      %9 = sbr.rel (0) target = $region5
    $region4: #{tpu_custom_call.1} parent=1 // pred_region
      %s11 = ssub.s32 256, 256
      %12 = vsyncadd [#allocation3], %s11
      %s13 = sshll.u32 [#allocation2], 4
      %s14 = int_to_ptr.vmem [resolvable:$true] %s13
      %19 = dma.hbm_to_vmem [thread:$0]  %s0, 256, %s14, [#allocation3], 128, 128, 8
    $region5: #{tpu_custom_call.1} parent=1 // pred_fallthru
      _
    // Predicated region
    $region6: #{tpu_custom_call.1} parent=1 // pred_check
      _
    $region7: #{tpu_custom_call.1} parent=1 // pred_check_branch
      %21 = sbr.rel (0) target = $region9
    $region8: #{tpu_custom_call.1} parent=1 // pred_region
      %22 = dma.done [#allocation3], 256
    $region9: #{tpu_custom_call.1} parent=1 // pred_fallthru
      _
    %v23 = vld [vmem:[#allocation2] sm:$0xff]
    %v24 = vld [vmem:[#allocation2 + $0x8] sm:$0xff]
    %v25 = vlaneseq
    %v26 = vshrl.u32 %v25, 7
    %v27 = vsub.s32 0, %v26
    %v28 = vrot.slane %v23, %v27
    %v29 = vlaneseq
    %v30 = vshrl.u32 %v29, 7
    %v31 = vsub.s32 7, %v30
    %v32 = vrot.slane %v24, %v31
    %vm35 = vcmask 1041408
    %v36 = vrot.slane %v23, 6
    %v37 = vrot.slane %v24, 6
    %v38 = vsel %vm35, %v36, %v37
    %v42 = vsel %vm35, %v28, %v36
    %v43 = vsel %vm35, %v37, %v32
    %vm46 = vcmask 1046528
    %v47 = vrot.slane %v42, 1
    %v48 = vrot.slane %v38, 1
    %v49 = vsel %vm46, %v47, %v48
    %v50 = vrot.slane %v43, 1
    %v51 = vsel %vm46, %v48, %v50
    %v55 = vadd.f32 %v42, %v49
    %v56 = vadd.f32 %v38, %v51
    %v57 = vadd.f32 %v43, %v50
    %vm61 = vcmask 1045504
    %v62 = vrot.slane %v55, 2
    %v63 = vrot.slane %v56, 2
    %v64 = vsel %vm61, %v62, %v63
    %v65 = vrot.slane %v57, 2
    %v66 = vsel %vm61, %v63, %v65
    %v69 = vadd.f32 %v55, %v64
    %v70 = vadd.f32 %v56, %v66
    %vm71 = vcmask 1043456
    %v72 = vrot.slane %v42, 4
    %v73 = vrot.slane %v38, 4
    %v74 = vsel %vm71, %v72, %v73
    %v75 = vrot.slane %v43, 4
    %v76 = vsel %vm71, %v73, %v75
    %v79 = vadd.f32 %v69, %v74
    %v80 = vadd.f32 %v70, %v76
    %v81 = vmul.f32 %v79, 0.2
    %v82 = vmul.f32 %v80, 0.2
    %vm83 = vcmask 130048
    %84 = vst.msk [vmem:[#allocation5] sm:$0xff] %vm83, %v81
    %85 = vst.msk [vmem:[#allocation5 + $0x8] sm:$0xff] %vm83, %v82
    // Predicated region
    $region10: #{tpu_custom_call.1} parent=1 // pred_check
      _
    $region11: #{tpu_custom_call.1} parent=1 // pred_check_branch
      %87 = sbr.rel (0) target = $region13
    $region12: #{tpu_custom_call.1} parent=1 // pred_region
      %s89 = ssub.s32 256, 256
      %90 = vsyncadd [#allocation4], %s89
      %s91 = sshll.u32 [#allocation5], 4
      %s92 = int_to_ptr.vmem [resolvable:$true] %s91
      %97 = dma.vmem_to_hbm [thread:$0]  %s92, 256, %s1, [#allocation4], 128, 128, 8
    $region13: #{tpu_custom_call.1} parent=1 // pred_fallthru
      _
    // Predicated region
    $region14: #{tpu_custom_call.1} parent=1 // pred_check
      _
    $region15: #{tpu_custom_call.1} parent=1 // pred_check_branch
      %99 = sbr.rel (0) target = $region17
    $region16: #{tpu_custom_call.1} parent=1 // pred_region
      %100 = dma.done [#allocation4], 256
    $region17: #{tpu_custom_call.1} parent=1 // pred_fallthru
      _
    %101 = vsyncpa [#allocation3], 1
    %102 = vsyncpa [#allocation4], 1

</llo_original>
